<compile_context>
chip_gen: v7x
topology: tpu7x:2x2x1
jax: 0.10.0
libtpu: 0.0.40
codegen_flags: <defaults>
</compile_context>

<pallas_src>
import functools

import jax
import jax.numpy as jnp
from jax.experimental import pallas as pl
from jax.experimental.pallas import tpu as pltpu


# ----------------------------- helpers -------------------------------------- #

def _round_up(x, m):
    return (x + m - 1) // m * m


def _pick_batch_tile(batch, if_softmax):
    if if_softmax:
        # softmax(dim=0) reduces over batch: keep the whole batch in one block.
        # TODO(synk): two-pass (block max/sum, then normalize) batch-tiled
        # softmax for very large batch sizes.
        return batch
    for t in (512, 256, 128, 64, 32, 16, 8):
        if batch % t == 0:
            return t
    return batch


def _pick_class_tile(nc_pad):
    for t in (1024, 512, 256, 128):
        if nc_pad % t == 0:
            return t
    return nc_pad


def _vmem_limit(block_bytes):
    # double-buffered blocks + headroom; clamp to be safe on v5e(16M scoped
    # default)/v6e(32M)/v7x(64M physical).
    need = 2 * int(block_bytes) + (1 << 20)
    return int(min(max(need, 4 << 20), 32 << 20))


def _softmax_dim0(x):
    # nn.Softmax(dim=0): softmax across the batch (sublane) axis, per column.
    m = jnp.max(x, axis=0, keepdims=True)
    e = jnp.exp(x - m)
    return e * pl.reciprocal(jnp.sum(e, axis=0, keepdims=True), approx=True)


# ----------------------------- kernels -------------------------------------- #

def _matmul_kernel(if_softmax, img_ref, txt_ref, out_ref):
    # cls = x_img @ x_txt_t ; x_txt pre-transposed + lane-padded in the wrapper
    # so the MXU sees a canonical [M,K]@[K,N] (no RHS transpose emitted).
    s = jnp.dot(img_ref[...], txt_ref[...], preferred_element_type=jnp.float32)
    if if_softmax:
        s = _softmax_dim0(s)
    out_ref[...] = s.astype(out_ref.dtype)


def _hadama_kernel(if_softmax, scale_img, img_ref, txt_ref, w_ref, b_ref, out_ref):
    # cls[b, c] = sum_k x_img[b,k] * x_txt[c,k] * w[k] + bias
    # Elementwise scale in f32 (v5e VPU has no bf16), applied to the operand
    # with fewer rows; scalar bias comes from SMEM.
    img = img_ref[...].astype(jnp.float32)
    txt = txt_ref[...].astype(jnp.float32)
    w = w_ref[...].astype(jnp.float32)
    if scale_img:
        img = img * w                       # (tm, K) * (1, K)
    else:
        txt = txt * w                       # (K, tn) * (K, 1)
    s = jnp.dot(img, txt, preferred_element_type=jnp.float32)
    s = s + b_ref[0, 0]
    if if_softmax:
        s = _softmax_dim0(s)
    out_ref[...] = s.astype(out_ref.dtype)


def _concat_kernel(if_softmax, img_ref, txt_ref, wfc_ref, bfc_ref,
                   wci_ref, wct_ref, bcls_ref, out_ref):
    # torch forward .float()s before both Linears -> compute in f32 in-kernel.
    wfc = wfc_ref[...].astype(jnp.float32)
    txt = txt_ref[...].astype(jnp.float32)
    # txt_proj = fc(x_txt.T).T = W_fc @ x_txt + b_fc[:, None]    (tm, Bt)
    tp = jnp.dot(wfc, txt, preferred_element_type=jnp.float32)
    tp = tp + bfc_ref[...].astype(jnp.float32)
    # concat([x_img, txt_proj], 1) @ W_cls.T == split matmul; W_cls halves are
    # pre-transposed + lane-padded in the wrapper -> canonical [M,K]@[K,N].
    s = jnp.dot(img_ref[...].astype(jnp.float32),
                wci_ref[...].astype(jnp.float32),
                preferred_element_type=jnp.float32)
    s = s + jnp.dot(tp, wct_ref[...].astype(jnp.float32),
                    preferred_element_type=jnp.float32)
    s = s + bcls_ref[...].astype(jnp.float32)
    if if_softmax:
        s = _softmax_dim0(s)
    out_ref[...] = s.astype(out_ref.dtype)


# ----------------------------- wrapper --------------------------------------- #

def finegrained_forward(x_img, x_txt, params, *, fusion_type, if_softmax,
                        batch_size, num_classes, in_channels):
    B = x_img.shape[0]
    NC = num_classes
    NC_pad = _round_up(NC, 128)
    tm = _pick_batch_tile(B, if_softmax)
    tn = _pick_class_tile(NC_pad)
    grid = (B // tm, NC_pad // tn)
    sem = ("parallel", "parallel")
    out_shape = jax.ShapeDtypeStruct((B, NC_pad), jnp.float32)
    out_spec = pl.BlockSpec((tm, tn), lambda i, j: (i, j))
    isz = jnp.dtype(x_img.dtype).itemsize
    trans = B * NC_pad if if_softmax else 0

    if fusion_type == 'matmul':
        K = x_img.shape[1]
        txt_t = jnp.pad(x_txt.T, ((0, 0), (0, NC_pad - NC)))
        kernel = functools.partial(_matmul_kernel, if_softmax)
        in_specs = [pl.BlockSpec((tm, K), lambda i, j: (i, 0)),
                    pl.BlockSpec((K, tn), lambda i, j: (0, j))]
        block_bytes = (tm * K + K * tn) * isz + tm * tn * 4
        cost = pl.CostEstimate(
            flops=2 * B * K * NC_pad, transcendentals=trans,
            bytes_accessed=(B * K + K * NC_pad) * isz + B * NC_pad * 4)
        out = pl.pallas_call(
            kernel, out_shape=out_shape, grid=grid,
            in_specs=in_specs, out_specs=out_spec, cost_estimate=cost,
            compiler_params=pltpu.CompilerParams(
                dimension_semantics=sem,
                vmem_limit_bytes=_vmem_limit(block_bytes)),
        )(x_img, txt_t)
        return out[:, :NC]

    elif fusion_type == 'hadama':
        K = x_img.shape[1]
        txt_t = jnp.pad(x_txt.T, ((0, 0), (0, NC_pad - NC)))
        scale_img = tm <= tn
        w = (params['fc_cls_w'].reshape(1, K) if scale_img
             else params['fc_cls_w'].reshape(K, 1))
        b = params['fc_cls_b'].reshape(1, 1)
        kernel = functools.partial(_hadama_kernel, if_softmax, scale_img)
        in_specs = [pl.BlockSpec((tm, K), lambda i, j: (i, 0)),
                    pl.BlockSpec((K, tn), lambda i, j: (0, j)),
                    pl.BlockSpec(w.shape, lambda i, j: (0, 0)),
                    pl.BlockSpec(memory_space=pltpu.MemorySpace.SMEM)]
        block_bytes = (tm * K + K * tn) * 4 + K * 4 + tm * tn * 4
        cost = pl.CostEstimate(
            flops=2 * B * K * NC_pad + B * K, transcendentals=trans,
            bytes_accessed=(B * K + K * NC_pad + K) * isz + B * NC_pad * 4)
        out = pl.pallas_call(
            kernel, out_shape=out_shape, grid=grid,
            in_specs=in_specs, out_specs=out_spec, cost_estimate=cost,
            compiler_params=pltpu.CompilerParams(
                dimension_semantics=sem,
                vmem_limit_bytes=_vmem_limit(block_bytes)),
        )(x_img, txt_t, w, b)
        return out[:, :NC]

    elif fusion_type == 'concat':
        c_img = x_img.shape[1]
        bt = x_txt.shape[1]
        wcls = params['fc_cls_w']                                   # (NC, C_img+Bt)
        wci_t = jnp.pad(wcls[:, :c_img].T, ((0, 0), (0, NC_pad - NC)))
        wct_t = jnp.pad(wcls[:, c_img:].T, ((0, 0), (0, NC_pad - NC)))
        bcls = jnp.pad(params['fc_cls_b'].reshape(1, NC),
                       ((0, 0), (0, NC_pad - NC)))
        wfc = params['fc_w']                                        # (B, NC)
        bfc = params['fc_b'].reshape(B, 1)
        kernel = functools.partial(_concat_kernel, if_softmax)
        in_specs = [pl.BlockSpec((tm, c_img), lambda i, j: (i, 0)),
                    pl.BlockSpec((NC, bt), lambda i, j: (0, 0)),
                    pl.BlockSpec((tm, NC), lambda i, j: (i, 0)),
                    pl.BlockSpec((tm, 1), lambda i, j: (i, 0)),
                    pl.BlockSpec((c_img, tn), lambda i, j: (0, j)),
                    pl.BlockSpec((bt, tn), lambda i, j: (0, j)),
                    pl.BlockSpec((1, tn), lambda i, j: (0, j))]
        block_bytes = (tm * c_img + NC * bt + tm * NC + tm
                       + c_img * tn + bt * tn + tn + tm * tn) * 4
        cost = pl.CostEstimate(
            flops=2 * B * NC * bt + 2 * B * (c_img + bt) * NC_pad,
            transcendentals=trans,
            bytes_accessed=(B * c_img + NC * bt + B * NC + B
                            + (c_img + bt + 1) * NC_pad) * isz + B * NC_pad * 4)
        out = pl.pallas_call(
            kernel, out_shape=out_shape, grid=grid,
            in_specs=in_specs, out_specs=out_spec, cost_estimate=cost,
            compiler_params=pltpu.CompilerParams(
                dimension_semantics=sem,
                vmem_limit_bytes=_vmem_limit(block_bytes)),
        )(x_img, x_txt, wfc, bfc, wci_t, wct_t, bcls)
        return out[:, :NC]

    else:
        raise ValueError(f"unknown fusion_type: {fusion_type}")


# ----------------------------- pure-JAX reference ---------------------------- #

def ref_forward(x_img, x_txt, params, *, fusion_type, if_softmax,
                batch_size, num_classes, in_channels):
    x_img = x_img.astype(jnp.float32)
    x_txt = x_txt.astype(jnp.float32)
    if fusion_type == 'concat':
        xt = x_txt.T
        xt = xt @ params['fc_w'].T + params['fc_b']
        xt = xt.T
        x = jnp.concatenate([x_img, xt], axis=1)
        cls = x @ params['fc_cls_w'].T + params['fc_cls_b']
    elif fusion_type == 'hadama':
        xt = jnp.broadcast_to(x_txt[None, :, :],
                              (batch_size, num_classes, in_channels))
        xi = jnp.broadcast_to(x_img[:, None, :],
                              (batch_size, num_classes, in_channels))
        x = xi * xt
        cls = (x @ params['fc_cls_w'].T + params['fc_cls_b'])[..., 0]
    elif fusion_type == 'matmul':
        cls = x_img @ x_txt.T
    if if_softmax:
        cls = jax.nn.softmax(cls, axis=0)
    return cls


# ----------------------------- main ------------------------------------------ #

if __name__ == "__main__":
    key = jax.random.PRNGKey(0)
    batch_size, num_classes, in_channels = 8, 16, 32
    ks = jax.random.split(key, 10)

    params = {
        # fusion_type == 'concat': fc = Linear(num_classes -> batch_size)
        'fc_w': 0.02 * jax.random.normal(ks[0], (batch_size, num_classes),
                                         jnp.float32),
        'fc_b': 0.01 * jax.random.normal(ks[1], (batch_size,), jnp.float32),
        # fc_cls = Linear(in_channels -> num_classes)  (concat variant)
        'fc_cls_w': 0.02 * jax.random.normal(ks[2], (num_classes, in_channels),
                                             jnp.float32),
        'fc_cls_b': 0.01 * jax.random.normal(ks[3], (num_classes,), jnp.float32),
    }
    hadama_params = {
        # fc_cls = Linear(in_channels -> 1)  (hadama variant)
        'fc_cls_w': 0.02 * jax.random.normal(ks[4], (1, in_channels), jnp.float32),
        'fc_cls_b': 0.01 * jax.random.normal(ks[5], (1,), jnp.float32),
    }

    # matmul / hadama inputs: x_img (B, C), x_txt (NC, C)
    x_img_mm = jax.random.normal(ks[6], (batch_size, in_channels), jnp.float32)
    x_txt_mm = jax.random.normal(ks[7], (num_classes, in_channels), jnp.float32)
    # concat inputs: x_img (B, C_img), x_txt (NC, Bt), C_img + Bt == in_channels
    c_img, bt = 24, 8
    x_img_cc = jax.random.normal(ks[8], (batch_size, c_img), jnp.float32)
    x_txt_cc = jax.random.normal(ks[9], (num_classes, bt), jnp.float32)

    cases = []
    for sm in (False, True):
        cases.append(('matmul', x_img_mm, x_txt_mm, params, sm))
        cases.append(('hadama', x_img_mm, x_txt_mm, hadama_params, sm))
        cases.append(('concat', x_img_cc, x_txt_cc, params, sm))

    ok = True
    for fusion_type, xi, xt, p, sm in cases:
        out = finegrained_forward(xi, xt, p, fusion_type=fusion_type,
                                  if_softmax=sm, batch_size=batch_size,
                                  num_classes=num_classes,
                                  in_channels=in_channels)
        out = jax.block_until_ready(out)
        ref = ref_forward(xi, xt, p, fusion_type=fusion_type, if_softmax=sm,
                          batch_size=batch_size, num_classes=num_classes,
                          in_channels=in_channels)
        # approx EUP reciprocal on the softmax path -> slightly looser tol there
        tol = 2e-3 if sm else 1e-5
        ok &= bool(jnp.allclose(out, ref, atol=tol, rtol=tol))

    assert ok, "Pallas kernel output mismatch vs. pure-JAX reference"
    print("KERNEL_OK")
</pallas_src>

<mosaic_0001>
module attributes {stable_mosaic.version = 11 : i64} {
  func.func @_matmul_kernel(%arg0: i32, %arg1: i32, %arg2: memref<8x32xf32, #tpu.memory_space<vmem>>, %arg3: memref<32x128xf32, #tpu.memory_space<vmem>>, %arg4: memref<8x128xf32, #tpu.memory_space<vmem>>) attributes {dimension_semantics = [#tpu.dimension_semantics<parallel>, #tpu.dimension_semantics<parallel>], iteration_bounds = array<i64: 1, 1>, scalar_prefetch = 0 : i64, scratch_operands = 0 : i64, tpu.core_type = #tpu.core_type<tc>, window_params = [{transform_indices = @transform_0, window_bounds = array<i64: 8, 32>}, {transform_indices = @transform_1, window_bounds = array<i64: 32, 128>}, {transform_indices = @transform_2, window_bounds = array<i64: 8, 128>}]} {
    %c0 = arith.constant 0 : index
    %c0_0 = arith.constant 0 : index
    %0 = vector.load %arg2[%c0, %c0_0] : memref<8x32xf32, #tpu.memory_space<vmem>>, vector<8x32xf32>
    %c0_1 = arith.constant 0 : index
    %c0_2 = arith.constant 0 : index
    %1 = vector.load %arg3[%c0_1, %c0_2] : memref<32x128xf32, #tpu.memory_space<vmem>>, vector<32x128xf32>
    %cst = arith.constant dense<0.000000e+00> : vector<8x128xf32>
    %2 = tpu.matmul %0, %1, %cst {dimension_numbers = #tpu.dot_dimension_numbers<[1], [0], [0], [1], [0, 0, 1, 1], [], []>} : vector<8x32xf32>, vector<32x128xf32>, vector<8x128xf32> -> vector<8x128xf32>
    %c0_3 = arith.constant 0 : index
    %c0_4 = arith.constant 0 : index
    %3 = vector.load %arg4[%c0_3, %c0_4] : memref<8x128xf32, #tpu.memory_space<vmem>>, vector<8x128xf32>
    tpu.vector_store %arg4[%c0_3, %c0_4], %2 {strides = array<i32>} : memref<8x128xf32, #tpu.memory_space<vmem>>, vector<8x128xf32>,
    return
  }
  func.func @transform_0(%arg0: i32, %arg1: i32) -> (i32, i32) {
    %c0_i32 = arith.constant 0 : i32
    %c0_i32_0 = arith.constant 0 : i32
    return %arg0, %c0_i32 : i32, i32
  }
  func.func @transform_1(%arg0: i32, %arg1: i32) -> (i32, i32) {
    %c0_i32 = arith.constant 0 : i32
    %c0_i32_0 = arith.constant 0 : i32
    return %c0_i32, %arg1 : i32, i32
  }
  func.func @transform_2(%arg0: i32, %arg1: i32) -> (i32, i32) {
    %c0_i32 = arith.constant 0 : i32
    return %arg0, %arg1 : i32, i32
  }
}

</mosaic_0001>

<llo_original>
// kernel: tpu_custom_call.1
$region0: #{tpu_custom_call.1}
  #allocation0 [shape = 'u32[]', space=smem, size = 0x4, offset = 0x4, fixed_abs, tag = 'smem constant byte address 0x4 - core index']
  #allocation1 [shape = 'u32[144,128]{1,0:T(1,128)}', space=vmem, size = 0x12000, scoped, tag = 'internal scratch']
  %s0 = inlined_call_operand.hbm [shape: f32[8,32], index: 0, kind: input, shape index: {}]
  %s1 = inlined_call_operand.hbm [shape: f32[32,128], index: 1, kind: input, shape index: {}]
  %s2 = inlined_call_operand.hbm [shape: f32[8,128], index: 2, kind: output, shape index: {}]
  %s3 = sld [smem:[#allocation0]]
  $region26: #{tpu_custom_call.1} parent=0
    _
  %s5 = ssub.s32 1, %s3
  %s6 = scalar_select 0, %s5, %s3
  $region1: #{tpu_custom_call.1} parent=0
    #allocation2 [shape = 'u8[4096]{0}', space=vmem, size = 0x1000, scoped, tag = 'input window, operand 0, single buffered']
    #allocation3 [shape = 's32[1]{0}', space=sflag, size = 0x4, scoped, tag = 'scoped memory for tpu_custom_call.1']
    #allocation4 [shape = 's32[1]{0}', space=sflag, size = 0x4, scoped, tag = 'scoped memory for tpu_custom_call.1']
    #allocation5 [shape = 'u8[16384]{0}', space=vmem, size = 0x4000, scoped, tag = 'input window, operand 1, single buffered']
    #allocation6 [shape = 's32[1]{0}', space=sflag, size = 0x4, scoped, tag = 'scoped memory for tpu_custom_call.1']
    #allocation7 [shape = 'u8[4096]{0}', space=vmem, size = 0x1000, scoped, tag = 'output window, operand 0, single buffered']
    %7 = vsyncpa [#allocation3], 0
    %8 = vsyncpa [#allocation6], 0
    %9 = vsyncpa [#allocation4], 0
    // Predicated region
    $region2: #{tpu_custom_call.1} parent=1 // pred_check
      _
    $region3: #{tpu_custom_call.1} parent=1 // pred_check_branch
      %11 = sbr.rel (0) target = $region5
    $region4: #{tpu_custom_call.1} parent=1 // pred_region
      %s13 = ssub.s32 128, 128
      %14 = vsyncadd [#allocation3], %s13
      %s16 = sshll.u32 [#allocation2], 4
      %s17 = int_to_ptr.vmem [resolvable:$true] %s16
      %19 = dma.hbm_to_vmem [thread:$0]  %s0, 128, %s17, [#allocation3]
    $region5: #{tpu_custom_call.1} parent=1 // pred_fallthru
      _
    // Predicated region
    $region6: #{tpu_custom_call.1} parent=1 // pred_check
      _
    $region7: #{tpu_custom_call.1} parent=1 // pred_check_branch
      %21 = sbr.rel (0) target = $region9
    $region8: #{tpu_custom_call.1} parent=1 // pred_region
      %s23 = ssub.s32 512, 512
      %24 = vsyncadd [#allocation6], %s23
      %s25 = sshll.u32 [#allocation5], 4
      %s26 = int_to_ptr.vmem [resolvable:$true] %s25
      %31 = dma.hbm_to_vmem [thread:$0]  %s1, 512, %s26, [#allocation6], 128, 128, 8
    $region9: #{tpu_custom_call.1} parent=1 // pred_fallthru
      _
    // Predicated region
    $region10: #{tpu_custom_call.1} parent=1 // pred_check
      _
    $region11: #{tpu_custom_call.1} parent=1 // pred_check_branch
      %33 = sbr.rel (0) target = $region13
    $region12: #{tpu_custom_call.1} parent=1 // pred_region
      %34 = dma.done [#allocation3], 128
    $region13: #{tpu_custom_call.1} parent=1 // pred_fallthru
      _
    // Predicated region
    $region14: #{tpu_custom_call.1} parent=1 // pred_check
      _
    $region15: #{tpu_custom_call.1} parent=1 // pred_check_branch
      %36 = sbr.rel (0) target = $region17
    $region16: #{tpu_custom_call.1} parent=1 // pred_region
      %37 = dma.done [#allocation6], 512
    $region17: #{tpu_custom_call.1} parent=1 // pred_fallthru
      _
    %v38 = vld [vmem:[#allocation2] sm:$0xff]
    %v39 = vld [vmem:[#allocation5] sm:$0xff]
    %v40 = vld [vmem:[#allocation5 + $0x8] sm:$0xff]
    %v41 = vld [vmem:[#allocation5 + $0x10] sm:$0xff]
    %v42 = vld [vmem:[#allocation5 + $0x18] sm:$0xff]
    %vm43 = vcmask 261120
    %v45 = vsel %vm43, %v38, 0
    %47 = vmatprep.subr.mxu0 0.0
    %48 = vmatpush1.msra.mxu0 %v39
    %49 = vmatprep.subr.mxu0 0.0
    %50 = vmatpush1.msra.mxu0 %v40
    %51 = vmatprep.subr.mxu0 0.0
    %52 = vmatpush1.msra.mxu0 %v41
    %53 = vmatprep.subr.mxu0 0.0
    %54 = vmatpush1.msra.mxu0 %v42
    %55 = vmatprep.subr.mxu0 0.0
    %56 = vmatpush1.msra.mxu0 0.0
    %57 = vmatprep.subr.mxu0 0.0
    %58 = vmatpush1.msra.mxu0 0.0
    %59 = vmatprep.subr.mxu0 0.0
    %60 = vmatpush1.msra.mxu0 0.0
    %61 = vmatprep.subr.mxu0 0.0
    %62 = vmatpush1.msra.mxu0 0.0
    %63 = vmatprep.subr.mxu0 0.0
    %64 = vmatpush1.msra.mxu0 0.0
    %65 = vmatprep.subr.mxu0 0.0
    %66 = vmatpush1.msra.mxu0 0.0
    %67 = vmatprep.subr.mxu0 0.0
    %68 = vmatpush1.msra.mxu0 0.0
    %69 = vmatprep.subr.mxu0 0.0
    %70 = vmatpush1.msra.mxu0 0.0
    %71 = vmatprep.subr.mxu0 0.0
    %72 = vmatpush1.msra.mxu0 0.0
    %73 = vmatprep.subr.mxu0 0.0
    %74 = vmatpush1.msra.mxu0 0.0
    %75 = vmatprep.subr.mxu0 0.0
    %76 = vmatpush1.msra.mxu0 0.0
    %77 = vmatprep.subr.mxu0 0.0
    %78 = vmatpush1.msra.mxu0 0.0
    %79 = vmatprep.subr.mxu0 0.0
    %80 = vmatpush1.msra.mxu0 0.0
    %81 = vmatprep.subr.mxu0 0.0
    %82 = vmatpush1.msra.mxu0 0.0
    %83 = vmatprep.subr.mxu0 0.0
    %84 = vmatpush1.msra.mxu0 0.0
    %85 = vmatprep.subr.mxu0 0.0
    %86 = vmatpush1.msra.mxu0 0.0
    %87 = vmatprep.subr.mxu0 0.0
    %88 = vmatpush1.msra.mxu0 0.0
    %89 = vmatprep.subr.mxu0 0.0
    %90 = vmatpush1.msra.mxu0 0.0
    %91 = vmatprep.subr.mxu0 0.0
    %92 = vmatpush1.msra.mxu0 0.0
    %93 = vmatprep.subr.mxu0 0.0
    %94 = vmatpush1.msra.mxu0 0.0
    %95 = vmatprep.subr.mxu0 0.0
    %96 = vmatpush1.msra.mxu0 0.0
    %97 = vmatprep.subr.mxu0 0.0
    %98 = vmatpush1.msra.mxu0 0.0
    %99 = vmatprep.subr.mxu0 0.0
    %100 = vmatpush1.msra.mxu0 0.0
    %101 = vmatprep.subr.mxu0 0.0
    %102 = vmatpush1.msra.mxu0 0.0
    %103 = vmatprep.subr.mxu0 0.0
    %104 = vmatpush1.msra.mxu0 0.0
    %105 = vmatprep.subr.mxu0 0.0
    %106 = vmatpush1.msra.mxu0 0.0
    %107 = vmatprep.subr.mxu0 0.0
    %108 = vmatpush1.msra.mxu0 0.0
    %109 = vmatprep.subr.mxu0 0.0
    %110 = vmatpush1.msra.mxu0 0.0
    %111 = vmatprep.mubr.f32.mxu0 0.0
    %112 = vmatmul.mubr.f32.gmra.mrb[0].mxu0 %v45
    %v113 = vpop.f32.mrb[0].mxu0
    %v114 = vadd.f32 0.0, %v113
    %v115 = vpop.f32.mrb[0].mxu0
    %116 = vdwg.mxu0
    %117 = vst [vmem:[#allocation7] sm:$0xff] %v114
    // Predicated region
    $region18: #{tpu_custom_call.1} parent=1 // pred_check
      _
    $region19: #{tpu_custom_call.1} parent=1 // pred_check_branch
      %119 = sbr.rel (0) target = $region21
    $region20: #{tpu_custom_call.1} parent=1 // pred_region
      %s121 = ssub.s32 128, 128
      %122 = vsyncadd [#allocation4], %s121
      %s124 = sshll.u32 [#allocation7], 4
      %s125 = int_to_ptr.vmem [resolvable:$true] %s124
      %127 = dma.vmem_to_hbm [thread:$0]  %s125, 128, %s2, [#allocation4]
    $region21: #{tpu_custom_call.1} parent=1 // pred_fallthru
      _
    // Predicated region
    $region22: #{tpu_custom_call.1} parent=1 // pred_check
      _
    $region23: #{tpu_custom_call.1} parent=1 // pred_check_branch
      %129 = sbr.rel (0) target = $region25
    $region24: #{tpu_custom_call.1} parent=1 // pred_region
      %130 = dma.done [#allocation4], 128
    $region25: #{tpu_custom_call.1} parent=1 // pred_fallthru
      _
    %131 = vsyncpa [#allocation3], 1
    %132 = vsyncpa [#allocation6], 1
    %133 = vsyncpa [#allocation4], 1

</llo_original>
